<compile_context>
chip_gen: v5e
topology: v5e:2x2
jax: 0.10.0
libtpu: 0.0.40
codegen_flags: <defaults>
</compile_context>

<pallas_src>
import math

import jax
import jax.numpy as jnp
from jax.experimental import pallas as pl
from jax.experimental.pallas import tpu as pltpu

BN_EPS = 1e-5


# ----------------------------------------------------------------------------- kernel
def _make_kernel(n_hidden, compute_dtype):
    """Fused MLP kernel for `n_hidden` hidden layers + 1 output layer.

    Ref order: (x_ref, w1_aug, b1_aug, w2_aug, ..., w_hid_aug, w_out_aug, o_ref)
      x_ref    : (tb, d_in)          float32  (natural layout, batch-tiled)
      w1_aug   : (h1+1, d_in)        compute_dtype  (BN folded; extra zero row)
      b1_aug   : (h1+1, 1)           float32  (bias; bottom entry = 1 seeds ones row)
      wl_aug   : (hl+1, h(l-1)+1)    compute_dtype  (bias column + ones-row propagator)
      w_out_aug: (1, h_last+1)       compute_dtype  (bias column)
      o_ref    : (1, tb)             float32  (lane-dense output slab)
    """

    def kernel(*refs):
        x_ref, o_ref = refs[0], refs[-1]
        p = refs[1:-1]

        # Layer 1: contract the feature axes of W1 and the natural-layout x block
        # directly on the MXU (no wrapper-side or in-kernel transpose), cast in-kernel.
        w1 = p[0][...]
        b1 = p[1][...]
        x = x_ref[...].astype(compute_dtype)                       # (tb, d_in)
        z = jax.lax.dot_general(
            w1, x, (((1,), (1,)), ((), ())),
            preferred_element_type=jnp.float32) + b1               # (h1+1, tb)
        # Bottom row of z is exactly 1 (zero weight row + bias 1); ReLU keeps it at 1,
        # so it carries every later layer's bias through the MXU contraction.
        h = jnp.maximum(z, 0.0).astype(compute_dtype)

        for li in range(1, n_hidden):                              # hidden layers 2..N
            w = p[1 + li][...]
            z = jnp.dot(w, h, preferred_element_type=jnp.float32)  # bias via ones row
            h = jnp.maximum(z, 0.0).astype(compute_dtype)

        w_out = p[1 + n_hidden][...]
        z = jnp.dot(w_out, h, preferred_element_type=jnp.float32)  # (1, tb), bias folded
        # Exact sigmoid: exp on the EUP, one tiny (1, tb) divide.
        o_ref[...] = (1.0 / (1.0 + jnp.exp(-z))).astype(o_ref.dtype)

    return kernel


# ----------------------------------------------------------------------------- tiling
def _num_tensorcores():
    """Best-effort TensorCore count (v7x has 2 per chip); default 1 (v5e/v6e)."""
    try:
        info = pltpu.get_tpu_info()
        for attr in ("num_cores", "core_count", "num_tensorcores"):
            v = getattr(info, attr, None)
            if v:
                return int(v)
    except Exception:
        pass
    return 1


def _pick_batch_tile(padded_b, n_cores):
    """Lane-dense batch tile (multiple of 128).

    The kernel is fixed-overhead bound (~0.35 us / grid step) at these model sizes, so
    use the fewest, largest tiles: grid=(1,) on single-TC chips; one step per core on
    multi-core chips when the batch splits evenly.  VMEM is not a constraint — the
    double-buffered f32 x tile is 2 * tb * d_in * 4 B (~1 MiB at tb=4096, d_in=32) and
    the resident weights are < 20 KiB, far below every generation's scoped default.
    """
    max_tb = 4096
    if padded_b <= max_tb:
        if n_cores > 1 and padded_b % (n_cores * 128) == 0 and padded_b // n_cores >= 128:
            return padded_b // n_cores          # one grid step per TensorCore
        return padded_b                          # grid=(1,)
    tb = max_tb
    while padded_b % tb:
        tb -= 128
    return max(tb, 128)


# ----------------------------------------------------------------------------- wrapper
def binary_classifier_forward(x, flat_params, *, batch_tile=None,
                              compute_dtype=jnp.bfloat16):
    """x: (B, D_in) float32.  flat_params: output of fold_params().

    Returns (B, 1) float32, matching the PyTorch module's eval-mode output.
    """
    b_sz, d_in = x.shape
    padded_b = max(128, -(-b_sz // 128) * 128)
    if padded_b != b_sz:
        # Only touches x when B is not 128-aligned (cheap row pad; no transpose/cast).
        x = jnp.pad(x, ((0, padded_b - b_sz), (0, 0)))

    if batch_tile is None:
        tb = _pick_batch_tile(padded_b, _num_tensorcores())
    else:
        tb = batch_tile
    assert padded_b % tb == 0 and (tb % 128 == 0 or tb == padded_b)

    n_hidden = len(flat_params) - 2          # [W1_aug, b1_aug, W2..Wk_aug, Wout_aug]
    kernel = _make_kernel(n_hidden, compute_dtype)

    in_specs = [pl.BlockSpec((tb, d_in), lambda i: (i, 0))]           # x: batch-tiled
    in_specs += [pl.BlockSpec(p.shape, lambda i: (0, 0))              # params: resident
                 for p in flat_params]
    out_specs = pl.BlockSpec((1, tb), lambda i: (0, i))               # lane-dense slab

    out = pl.pallas_call(
        kernel,
        out_shape=jax.ShapeDtypeStruct((1, padded_b), jnp.float32),
        grid=(padded_b // tb,),
        in_specs=in_specs,
        out_specs=out_specs,
        compiler_params=pltpu.CompilerParams(
            dimension_semantics=("parallel",)),                       # megacore on v7x
    )(x, *flat_params)

    return out.reshape(-1, 1)[:b_sz]                                  # (B, 1)


# ----------------------------------------------------------------------------- params
def make_torch_params(key, input_shape, hidden_sizes):
    """Synthetic parameters mirroring the PyTorch module (torch layouts, f32)."""
    hidden = []
    prev = input_shape
    for hs in hidden_sizes:
        key, kw, kb = jax.random.split(key, 3)
        bound = 1.0 / math.sqrt(prev)
        hidden.append(dict(
            W=jax.random.uniform(kw, (hs, prev), jnp.float32, -bound, bound),
            b=jax.random.uniform(kb, (hs,), jnp.float32, -bound, bound),
            bn=dict(gamma=jnp.ones((hs,), jnp.float32),
                    beta=jnp.zeros((hs,), jnp.float32),
                    mean=jnp.zeros((hs,), jnp.float32),
                    var=jnp.ones((hs,), jnp.float32))))
        prev = hs
    key, kw, kb = jax.random.split(key, 3)
    bound = 1.0 / math.sqrt(prev)
    out = dict(W=jax.random.uniform(kw, (1, prev), jnp.float32, -bound, bound),
               b=jax.random.uniform(kb, (1,), jnp.float32, -bound, bound))
    return dict(hidden=hidden, out=out)


def fold_params(params, use_batch_norm, compute_dtype=jnp.bfloat16):
    """Fold BN (inference running stats) into each Linear, then fold every bias except
    the first layer's into the weight matrix via the 'ones row' augmentation:

        layer 1:   W1' = [[sc*W1],[0]],  b1' = [b1; 1]        (bias stays f32; its 1
                                                               seeds the ones row)
        layer l>1: Wl' = [[sc*Wl, bl'], [0...0, 1]]            (bias as an MXU column,
                                                               ones row propagated)
        output:    Wout' = [Wout, bout]                        (bias column only)

    Weights are stored (out, in) in `compute_dtype` (MXU operands).
    """
    scaled = []
    for lyr in params["hidden"]:
        w, b = lyr["W"], lyr["b"]
        if use_batch_norm:
            bn = lyr["bn"]
            sc = bn["gamma"] * jax.lax.rsqrt(bn["var"] + BN_EPS)
            w = w * sc[:, None]
            b = b * sc + (bn["beta"] - bn["mean"] * sc)
        scaled.append((w, b))
    scaled.append((params["out"]["W"], params["out"]["b"]))

    flat = []
    # First hidden layer: extra zero output row; separate f32 bias with a trailing 1.
    w0, b0 = scaled[0]
    w0_aug = jnp.concatenate([w0, jnp.zeros((1, w0.shape[1]), w0.dtype)], axis=0)
    b0_aug = jnp.concatenate([b0, jnp.ones((1,), b0.dtype)]).reshape(-1, 1)
    flat.append(w0_aug.astype(compute_dtype))
    flat.append(b0_aug.astype(jnp.float32))
    # Middle hidden layers: bias column + ones-row propagator row.
    for (w, b) in scaled[1:-1]:
        out_d, in_d = w.shape
        w_aug = jnp.zeros((out_d + 1, in_d + 1), w.dtype)
        w_aug = w_aug.at[:out_d, :in_d].set(w)
        w_aug = w_aug.at[:out_d, in_d].set(b)
        w_aug = w_aug.at[out_d, in_d].set(1.0)
        flat.append(w_aug.astype(compute_dtype))
    # Output layer: bias column only.
    w, b = scaled[-1]
    flat.append(jnp.concatenate([w, b.reshape(-1, 1)], axis=1).astype(compute_dtype))
    return flat


# ----------------------------------------------------------------------------- refs
def _reference_torch(x, params, use_batch_norm):
    """Pure-JAX, f32, unfolded — mirrors the PyTorch module in eval mode."""
    h = x
    for lyr in params["hidden"]:
        h = h @ lyr["W"].T + lyr["b"]
        if use_batch_norm:
            bn = lyr["bn"]
            h = (h - bn["mean"]) * jax.lax.rsqrt(bn["var"] + BN_EPS) * bn["gamma"] + bn["beta"]
        h = jnp.maximum(h, 0.0)            # ReLU; Dropout = identity (eval)
    z = h @ params["out"]["W"].T + params["out"]["b"]
    return jax.nn.sigmoid(z)               # (B, 1)


def _reference_folded(x, flat, compute_dtype=jnp.bfloat16):
    """Pure-JAX reference matching the kernel's folded/augmented bf16 math."""
    n_hidden = len(flat) - 2
    w1, b1 = flat[0], flat[1]
    z = jax.lax.dot_general(w1, x.astype(compute_dtype),
                            (((1,), (1,)), ((), ())),
                            preferred_element_type=jnp.float32) + b1
    h = jnp.maximum(z, 0.0).astype(compute_dtype)
    for li in range(1, n_hidden):
        z = jnp.dot(flat[1 + li], h, preferred_element_type=jnp.float32)
        h = jnp.maximum(z, 0.0).astype(compute_dtype)
    z = jnp.dot(flat[1 + n_hidden], h, preferred_element_type=jnp.float32)
    return (1.0 / (1.0 + jnp.exp(-z))).T    # (B, 1)


# ----------------------------------------------------------------------------- main
if __name__ == "__main__":
    # Module hyper-params (BinaryClassifier(__init__) signature)
    input_shape = 32
    hidden_sizes = [64, 32]
    dropout_rate = 0.5        # identity at inference
    use_batch_norm = True     # folded into weights for inference

    key = jax.random.PRNGKey(0)
    key, kx = jax.random.split(key)
    batch = 500               # deliberately unaligned: exercises the pad/slice path
    x = jax.random.normal(kx, (batch, input_shape), jnp.float32)

    raw_params = make_torch_params(key, input_shape, hidden_sizes)
    flat_params = fold_params(raw_params, use_batch_norm)

    out = binary_classifier_forward(x, flat_params)
    out = jax.block_until_ready(out)
    assert out.shape == (batch, 1)

    # Tight check against a reference with identical folded/bf16 math (exact sigmoid).
    ref_match = _reference_folded(x, flat_params)
    assert jnp.allclose(out, ref_match, atol=5e-3, rtol=0.0), \
        float(jnp.max(jnp.abs(out - ref_match)))

    # Looser check against the exact f32 PyTorch-style forward (bf16 MXU budget).
    ref_f32 = _reference_torch(x, raw_params, use_batch_norm)
    assert jnp.allclose(out, ref_f32, atol=3e-2, rtol=0.0), \
        float(jnp.max(jnp.abs(out - ref_f32)))

    # TODO(synk): training-mode Dropout / BatchNorm batch statistics not implemented
    # (inference semantics only, matching model.eval()).
    print("KERNEL_OK")
</pallas_src>

<mosaic_0001>
module attributes {stable_mosaic.version = 11 : i64} {
  func.func @kernel(%arg0: i32, %arg1: memref<512x32xf32, #tpu.memory_space<vmem>>, %arg2: memref<65x32xbf16, #tpu.memory_space<vmem>>, %arg3: memref<65x1xf32, #tpu.memory_space<vmem>>, %arg4: memref<33x65xbf16, #tpu.memory_space<vmem>>, %arg5: memref<1x33xbf16, #tpu.memory_space<vmem>>, %arg6: memref<1x512xf32, #tpu.memory_space<vmem>>) attributes {dimension_semantics = [#tpu.dimension_semantics<parallel>], iteration_bounds = array<i64: 1>, scalar_prefetch = 0 : i64, scratch_operands = 0 : i64, tpu.core_type = #tpu.core_type<tc>, window_params = [{transform_indices = @transform_0, window_bounds = array<i64: 512, 32>}, {pipeline_mode = #tpu.pipeline_mode<synchronous>, transform_indices = @transform_1, window_bounds = array<i64: 65, 32>}, {pipeline_mode = #tpu.pipeline_mode<synchronous>, transform_indices = @transform_2, window_bounds = array<i64: 65, 1>}, {pipeline_mode = #tpu.pipeline_mode<synchronous>, transform_indices = @transform_3, window_bounds = array<i64: 33, 65>}, {pipeline_mode = #tpu.pipeline_mode<synchronous>, transform_indices = @transform_4, window_bounds = array<i64: 1, 33>}, {transform_indices = @transform_5, window_bounds = array<i64: 1, 512>}]} {
    %c0 = arith.constant 0 : index
    %c0_0 = arith.constant 0 : index
    %0 = vector.load %arg2[%c0, %c0_0] : memref<65x32xbf16, #tpu.memory_space<vmem>>, vector<65x32xbf16>
    %c0_1 = arith.constant 0 : index
    %c0_2 = arith.constant 0 : index
    %1 = vector.load %arg3[%c0_1, %c0_2] : memref<65x1xf32, #tpu.memory_space<vmem>>, vector<65x1xf32>
    %c0_3 = arith.constant 0 : index
    %c0_4 = arith.constant 0 : index
    %2 = vector.load %arg1[%c0_3, %c0_4] : memref<512x32xf32, #tpu.memory_space<vmem>>, vector<512x32xf32>
    %3 = arith.truncf %2 : vector<512x32xf32> to vector<512x32xbf16>
    %cst = arith.constant dense<0.000000e+00> : vector<65x512xf32>
    %4 = tpu.matmul %0, %3, %cst {dimension_numbers = #tpu.dot_dimension_numbers<[1], [1], [0], [0], [0, 0, 1, 0], [], []>} : vector<65x32xbf16>, vector<512x32xbf16>, vector<65x512xf32> -> vector<65x512xf32>
    %5 = vector.broadcast %1 : vector<65x1xf32> to vector<65x512xf32>
    %6 = arith.addf %4, %5 : vector<65x512xf32>
    %cst_5 = arith.constant 0.000000e+00 : f32
    %7 = vector.broadcast %cst_5 : f32 to vector<65x512xf32>
    %8 = arith.maximumf %6, %7 : vector<65x512xf32>
    %9 = arith.truncf %8 : vector<65x512xf32> to vector<65x512xbf16>
    %c0_6 = arith.constant 0 : index
    %c0_7 = arith.constant 0 : index
    %10 = vector.load %arg4[%c0_6, %c0_7] : memref<33x65xbf16, #tpu.memory_space<vmem>>, vector<33x65xbf16>
    %cst_8 = arith.constant dense<0.000000e+00> : vector<33x512xf32>
    %11 = tpu.matmul %10, %9, %cst_8 {dimension_numbers = #tpu.dot_dimension_numbers<[1], [0], [0], [1], [0, 0, 1, 1], [], []>} : vector<33x65xbf16>, vector<65x512xbf16>, vector<33x512xf32> -> vector<33x512xf32>
    %cst_9 = arith.constant 0.000000e+00 : f32
    %12 = vector.broadcast %cst_9 : f32 to vector<33x512xf32>
    %13 = arith.maximumf %11, %12 : vector<33x512xf32>
    %14 = arith.truncf %13 : vector<33x512xf32> to vector<33x512xbf16>
    %c0_10 = arith.constant 0 : index
    %c0_11 = arith.constant 0 : index
    %15 = vector.load %arg5[%c0_10, %c0_11] : memref<1x33xbf16, #tpu.memory_space<vmem>>, vector<1x33xbf16>
    %cst_12 = arith.constant dense<0.000000e+00> : vector<1x512xf32>
    %16 = tpu.matmul %15, %14, %cst_12 {dimension_numbers = #tpu.dot_dimension_numbers<[1], [0], [0], [1], [0, 0, 1, 1], [], []>} : vector<1x33xbf16>, vector<33x512xbf16>, vector<1x512xf32> -> vector<1x512xf32>
    %cst_13 = arith.constant 0.000000e+00 : f32
    %17 = vector.broadcast %cst_13 : f32 to vector<1x512xf32>
    %18 = arith.subf %17, %16 : vector<1x512xf32>
    %19 = math.exp %18 : vector<1x512xf32>
    %cst_14 = arith.constant 1.000000e+00 : f32
    %20 = vector.broadcast %cst_14 : f32 to vector<1x512xf32>
    %21 = arith.addf %20, %19 : vector<1x512xf32>
    %cst_15 = arith.constant 1.000000e+00 : f32
    %22 = vector.broadcast %cst_15 : f32 to vector<1x512xf32>
    %23 = arith.divf %22, %21 : vector<1x512xf32>
    %c0_16 = arith.constant 0 : index
    %c0_17 = arith.constant 0 : index
    %24 = vector.load %arg6[%c0_16, %c0_17] : memref<1x512xf32, #tpu.memory_space<vmem>>, vector<1x512xf32>
    tpu.vector_store %arg6[%c0_16, %c0_17], %23 {strides = array<i32>} : memref<1x512xf32, #tpu.memory_space<vmem>>, vector<1x512xf32>,
    return
  }
  func.func @transform_0(%arg0: i32) -> (i32, i32) {
    %c0_i32 = arith.constant 0 : i32
    %c0_i32_0 = arith.constant 0 : i32
    return %arg0, %c0_i32 : i32, i32
  }
  func.func @transform_1(%arg0: i32) -> (i32, i32) {
    %c0_i32 = arith.constant 0 : i32
    %c0_i32_0 = arith.constant 0 : i32
    %c0_i32_1 = arith.constant 0 : i32
    return %c0_i32, %c0_i32_0 : i32, i32
  }
  func.func @transform_2(%arg0: i32) -> (i32, i32) {
    %c0_i32 = arith.constant 0 : i32
    %c0_i32_0 = arith.constant 0 : i32
    %c0_i32_1 = arith.constant 0 : i32
    return %c0_i32, %c0_i32_0 : i32, i32
  }
  func.func @transform_3(%arg0: i32) -> (i32, i32) {
    %c0_i32 = arith.constant 0 : i32
    %c0_i32_0 = arith.constant 0 : i32
    %c0_i32_1 = arith.constant 0 : i32
    return %c0_i32, %c0_i32_0 : i32, i32
  }
  func.func @transform_4(%arg0: i32) -> (i32, i32) {
    %c0_i32 = arith.constant 0 : i32
    %c0_i32_0 = arith.constant 0 : i32
    %c0_i32_1 = arith.constant 0 : i32
    return %c0_i32, %c0_i32_0 : i32, i32
  }
  func.func @transform_5(%arg0: i32) -> (i32, i32) {
    %c0_i32 = arith.constant 0 : i32
    %c0_i32_0 = arith.constant 0 : i32
    return %c0_i32, %arg0 : i32, i32
  }
}

</mosaic_0001>

<llo_original>
// kernel: tpu_custom_call.1
$region0: #{tpu_custom_call.1}
  #allocation0 [shape = 'u32[]', space=smem, size = 0x4, offset = 0x4, fixed_abs, tag = 'smem constant byte address 0x4 - core index']
  #allocation1 [shape = 'u32[72,128]{1,0:T(1,128)}', space=vmem, size = 0x9000, scoped, tag = 'internal scratch']
  %s0 = inlined_call_operand.vmem [shape: f32[512,32], index: 0, kind: input, shape index: {}]
  %s1 = inlined_call_operand.vmem [shape: bf16[65,32], index: 1, kind: input, shape index: {}]
  %s2 = inlined_call_operand.vmem [shape: f32[65,1], index: 2, kind: input, shape index: {}]
  %s3 = inlined_call_operand.vmem [shape: bf16[33,65], index: 3, kind: input, shape index: {}]
  %s4 = inlined_call_operand.vmem [shape: bf16[1,33], index: 4, kind: input, shape index: {}]
  %s5 = inlined_call_operand.hbm [shape: f32[1,512], index: 5, kind: output, shape index: {}]
  %s6 = sld [smem:[#allocation0]]
  $region30: #{tpu_custom_call.1} parent=0
    _
  %s8 = ssub.s32 1, %s6
  %s9 = scalar_select 0, %s8, %s6
  $region1: #{tpu_custom_call.1} parent=0
    #allocation2 [shape = 'u8[2048]{0}', space=vmem, size = 0x800, scoped, tag = 'output window, operand 0, single buffered']
    #allocation3 [shape = 's32[1]{0}', space=sflag, size = 0x4, scoped, tag = 'scoped memory for tpu_custom_call.1']
    %10 = vsyncpa [#allocation3], 0
    // Predicated region
    $region2: #{tpu_custom_call.1} parent=1 // pred_check
      _
    $region3: #{tpu_custom_call.1} parent=1 // pred_check_branch
      %12 = sbr.rel (0) target = $region5
    $region4: #{tpu_custom_call.1} parent=1 // pred_region
      _
    $region5: #{tpu_custom_call.1} parent=1 // pred_fallthru
      _
    // Predicated region
    $region6: #{tpu_custom_call.1} parent=1 // pred_check
      _
    $region7: #{tpu_custom_call.1} parent=1 // pred_check_branch
      %14 = sbr.rel (0) target = $region9
    $region8: #{tpu_custom_call.1} parent=1 // pred_region
      _
    $region9: #{tpu_custom_call.1} parent=1 // pred_fallthru
      _
    // Predicated region
    $region10: #{tpu_custom_call.1} parent=1 // pred_check
      _
    $region11: #{tpu_custom_call.1} parent=1 // pred_check_branch
      %16 = sbr.rel (0) target = $region13
    $region12: #{tpu_custom_call.1} parent=1 // pred_region
      _
    $region13: #{tpu_custom_call.1} parent=1 // pred_fallthru
      _
    // Predicated region
    $region14: #{tpu_custom_call.1} parent=1 // pred_check
      _
    $region15: #{tpu_custom_call.1} parent=1 // pred_check_branch
      %18 = sbr.rel (0) target = $region17
    $region16: #{tpu_custom_call.1} parent=1 // pred_region
      _
    $region17: #{tpu_custom_call.1} parent=1 // pred_fallthru
      _
    // Predicated region
    $region18: #{tpu_custom_call.1} parent=1 // pred_check
      _
    $region19: #{tpu_custom_call.1} parent=1 // pred_check_branch
      %20 = sbr.rel (0) target = $region21
    $region20: #{tpu_custom_call.1} parent=1 // pred_region
      _
    $region21: #{tpu_custom_call.1} parent=1 // pred_fallthru
      _
    %v22 = vld [vmem:[%s1] sm:$0xf]
    %v23 = vld [vmem:[%s1 + $0x4] sm:$0xf]
    %v24 = vld [vmem:[%s1 + $0x8] sm:$0xf]
    %v25 = vld [vmem:[%s1 + $0xc] sm:$0xf]
    %v26 = vld [vmem:[%s1 + $0x10] sm:$0xf]
    %v27 = vld [vmem:[%s1 + $0x14] sm:$0xf]
    %v28 = vld [vmem:[%s1 + $0x18] sm:$0xf]
    %v29 = vld [vmem:[%s1 + $0x1c] sm:$0xf]
    %v30 = vld [vmem:[%s1 + $0x20] sm:$0x1]
    %v31 = vld [vmem:[%s2] sm:$0xff]
    %v32 = vld [vmem:[%s2 + $0x8] sm:$0xff]
    %v33 = vld [vmem:[%s2 + $0x10] sm:$0xff]
    %v34 = vld [vmem:[%s2 + $0x18] sm:$0xff]
    %v35 = vld [vmem:[%s2 + $0x20] sm:$0xff]
    %v36 = vld [vmem:[%s2 + $0x28] sm:$0xff]
    %v37 = vld [vmem:[%s2 + $0x30] sm:$0xff]
    %v38 = vld [vmem:[%s2 + $0x38] sm:$0xff]
    %v39 = vld [vmem:[%s2 + $0x40] sm:$0x1]
    %v40 = vld [vmem:[%s0] sm:$0xff]
    %v41 = vld [vmem:[%s0 + $0x8] sm:$0xff]
    %v42 = vld [vmem:[%s0 + $0x10] sm:$0xff]
    %v43 = vld [vmem:[%s0 + $0x18] sm:$0xff]
    %v44 = vld [vmem:[%s0 + $0x20] sm:$0xff]
    %v45 = vld [vmem:[%s0 + $0x28] sm:$0xff]
    %v46 = vld [vmem:[%s0 + $0x30] sm:$0xff]
    %v47 = vld [vmem:[%s0 + $0x38] sm:$0xff]
    %v48 = vld [vmem:[%s0 + $0x40] sm:$0xff]
    %v49 = vld [vmem:[%s0 + $0x48] sm:$0xff]
    %v50 = vld [vmem:[%s0 + $0x50] sm:$0xff]
    %v51 = vld [vmem:[%s0 + $0x58] sm:$0xff]
    %v52 = vld [vmem:[%s0 + $0x60] sm:$0xff]
    %v53 = vld [vmem:[%s0 + $0x68] sm:$0xff]
    %v54 = vld [vmem:[%s0 + $0x70] sm:$0xff]
    %v55 = vld [vmem:[%s0 + $0x78] sm:$0xff]
    %v56 = vld [vmem:[%s0 + $0x80] sm:$0xff]
    %v57 = vld [vmem:[%s0 + $0x88] sm:$0xff]
    %v58 = vld [vmem:[%s0 + $0x90] sm:$0xff]
    %v59 = vld [vmem:[%s0 + $0x98] sm:$0xff]
    %v60 = vld [vmem:[%s0 + $0xa0] sm:$0xff]
    %v61 = vld [vmem:[%s0 + $0xa8] sm:$0xff]
    %v62 = vld [vmem:[%s0 + $0xb0] sm:$0xff]
    %v63 = vld [vmem:[%s0 + $0xb8] sm:$0xff]
    %v64 = vld [vmem:[%s0 + $0xc0] sm:$0xff]
    %v65 = vld [vmem:[%s0 + $0xc8] sm:$0xff]
    %v66 = vld [vmem:[%s0 + $0xd0] sm:$0xff]
    %v67 = vld [vmem:[%s0 + $0xd8] sm:$0xff]
    %v68 = vld [vmem:[%s0 + $0xe0] sm:$0xff]
    %v69 = vld [vmem:[%s0 + $0xe8] sm:$0xff]
    %v70 = vld [vmem:[%s0 + $0xf0] sm:$0xff]
    %v71 = vld [vmem:[%s0 + $0xf8] sm:$0xff]
    %v72 = vld [vmem:[%s0 + $0x100] sm:$0xff]
    %v73 = vld [vmem:[%s0 + $0x108] sm:$0xff]
    %v74 = vld [vmem:[%s0 + $0x110] sm:$0xff]
    %v75 = vld [vmem:[%s0 + $0x118] sm:$0xff]
    %v76 = vld [vmem:[%s0 + $0x120] sm:$0xff]
    %v77 = vld [vmem:[%s0 + $0x128] sm:$0xff]
    %v78 = vld [vmem:[%s0 + $0x130] sm:$0xff]
    %v79 = vld [vmem:[%s0 + $0x138] sm:$0xff]
    %v80 = vld [vmem:[%s0 + $0x140] sm:$0xff]
    %v81 = vld [vmem:[%s0 + $0x148] sm:$0xff]
    %v82 = vld [vmem:[%s0 + $0x150] sm:$0xff]
    %v83 = vld [vmem:[%s0 + $0x158] sm:$0xff]
    %v84 = vld [vmem:[%s0 + $0x160] sm:$0xff]
    %v85 = vld [vmem:[%s0 + $0x168] sm:$0xff]
    %v86 = vld [vmem:[%s0 + $0x170] sm:$0xff]
    %v87 = vld [vmem:[%s0 + $0x178] sm:$0xff]
    %v88 = vld [vmem:[%s0 + $0x180] sm:$0xff]
    %v89 = vld [vmem:[%s0 + $0x188] sm:$0xff]
    %v90 = vld [vmem:[%s0 + $0x190] sm:$0xff]
    %v91 = vld [vmem:[%s0 + $0x198] sm:$0xff]
    %v92 = vld [vmem:[%s0 + $0x1a0] sm:$0xff]
    %v93 = vld [vmem:[%s0 + $0x1a8] sm:$0xff]
    %v94 = vld [vmem:[%s0 + $0x1b0] sm:$0xff]
    %v95 = vld [vmem:[%s0 + $0x1b8] sm:$0xff]
    %v96 = vld [vmem:[%s0 + $0x1c0] sm:$0xff]
    %v97 = vld [vmem:[%s0 + $0x1c8] sm:$0xff]
    %v98 = vld [vmem:[%s0 + $0x1d0] sm:$0xff]
    %v99 = vld [vmem:[%s0 + $0x1d8] sm:$0xff]
    %v100 = vld [vmem:[%s0 + $0x1e0] sm:$0xff]
    %v101 = vld [vmem:[%s0 + $0x1e8] sm:$0xff]
    %v102 = vld [vmem:[%s0 + $0x1f0] sm:$0xff]
    %v103 = vld [vmem:[%s0 + $0x1f8] sm:$0xff]
    %v104 = vpack.c.bf16 %v41, %v40
    %v105 = vpack.c.bf16 %v43, %v42
    %v106 = vpack.c.bf16 %v45, %v44
    %v107 = vpack.c.bf16 %v47, %v46
    %v108 = vpack.c.bf16 %v49, %v48
    %v109 = vpack.c.bf16 %v51, %v50
    %v110 = vpack.c.bf16 %v53, %v52
    %v111 = vpack.c.bf16 %v55, %v54
    %v112 = vpack.c.bf16 %v57, %v56
    %v113 = vpack.c.bf16 %v59, %v58
    %v114 = vpack.c.bf16 %v61, %v60
    %v115 = vpack.c.bf16 %v63, %v62
    %v116 = vpack.c.bf16 %v65, %v64
    %v117 = vpack.c.bf16 %v67, %v66
    %v118 = vpack.c.bf16 %v69, %v68
    %v119 = vpack.c.bf16 %v71, %v70
    %v120 = vpack.c.bf16 %v73, %v72
    %v121 = vpack.c.bf16 %v75, %v74
    %v122 = vpack.c.bf16 %v77, %v76
    %v123 = vpack.c.bf16 %v79, %v78
    %v124 = vpack.c.bf16 %v81, %v80
    %v125 = vpack.c.bf16 %v83, %v82
    %v126 = vpack.c.bf16 %v85, %v84
    %v127 = vpack.c.bf16 %v87, %v86
    %v128 = vpack.c.bf16 %v89, %v88
    %v129 = vpack.c.bf16 %v91, %v90
    %v130 = vpack.c.bf16 %v93, %v92
    %v131 = vpack.c.bf16 %v95, %v94
    %v132 = vpack.c.bf16 %v97, %v96
    %v133 = vpack.c.bf16 %v99, %v98
    %v134 = vpack.c.bf16 %v101, %v100
    %v135 = vpack.c.bf16 %v103, %v102
    %137 = vset.pattern.permute.xlu0 0
    %138 = vperm.xlu0 %137, %v31
    %v139 = vpop.permute.xlu0 %138
    %142 = vset.pattern.permute.xlu0 0
    %143 = vperm.xlu0 %142, %v32
    %v144 = vpop.permute.xlu0 %143
    %147 = vset.pattern.permute.xlu0 0
    %148 = vperm.xlu0 %147, %v33
    %v149 = vpop.permute.xlu0 %148
    %152 = vset.pattern.permute.xlu0 0
    %153 = vperm.xlu0 %152, %v34
    %v154 = vpop.permute.xlu0 %153
    %157 = vset.pattern.permute.xlu0 0
    %158 = vperm.xlu0 %157, %v35
    %v159 = vpop.permute.xlu0 %158
    %162 = vset.pattern.permute.xlu0 0
    %163 = vperm.xlu0 %162, %v36
    %v164 = vpop.permute.xlu0 %163
    %167 = vset.pattern.permute.xlu0 0
    %168 = vperm.xlu0 %167, %v37
    %v169 = vpop.permute.xlu0 %168
    %172 = vset.pattern.permute.xlu0 0
    %173 = vperm.xlu0 %172, %v38
    %v174 = vpop.permute.xlu0 %173
    %177 = vset.pattern.permute.xlu0 0
    %178 = vperm.xlu0 %177, %v39
    %v179 = vpop.permute.xlu0 %178
    %v190 = vunpack.c.l.b16 %v22
    %v191 = vunpack.c.l.b16 %v23
    %v192 = vunpack.c.l.b16 %v24
    %v193 = vunpack.c.l.b16 %v25
    %v194 = vunpack.c.l.b16 %v26
    %v195 = vunpack.c.l.b16 %v27
    %v196 = vunpack.c.l.b16 %v28
    %v197 = vunpack.c.l.b16 %v29
    %v198 = vunpack.c.l.b16 %v30
    %v199 = vpack.c.b16 %v191, %v190
    %v200 = vpack.c.b16 %v193, %v192
    %v201 = vpack.c.b16 %v195, %v194
    %v202 = vpack.c.b16 %v197, %v196
    %v203 = vpack.c.b16 %v198, %v198
    %vm204 = vcmask 261120
    %v206 = vsel %vm204, %v199, 0
    %v209 = vsel %vm204, %v200, 0
    %v212 = vsel %vm204, %v201, 0
    %v215 = vsel %vm204, %v202, 0
    %v218 = vsel %vm204, %v203, 0
    %v221 = vsel %vm204, %v104, 0
    %v224 = vsel %vm204, %v105, 0
    %v227 = vsel %vm204, %v106, 0
    %v230 = vsel %vm204, %v107, 0
    %v233 = vsel %vm204, %v108, 0
    %v236 = vsel %vm204, %v109, 0
    %v239 = vsel %vm204, %v110, 0
    %v242 = vsel %vm204, %v111, 0
    %v245 = vsel %vm204, %v112, 0
    %v248 = vsel %vm204, %v113, 0
    %v251 = vsel %vm204, %v114, 0
    %v254 = vsel %vm204, %v115, 0
    %v257 = vsel %vm204, %v116, 0
    %v260 = vsel %vm204, %v117, 0
    %v263 = vsel %vm204, %v118, 0
    %v266 = vsel %vm204, %v119, 0
    %v269 = vsel %vm204, %v120, 0
    %v272 = vsel %vm204, %v121, 0
    %v275 = vsel %vm204, %v122, 0
    %v278 = vsel %vm204, %v123, 0
    %v281 = vsel %vm204, %v124, 0
    %v284 = vsel %vm204, %v125, 0
    %v287 = vsel %vm204, %v126, 0
    %v290 = vsel %vm204, %v127, 0
    %v293 = vsel %vm204, %v128, 0
    %v296 = vsel %vm204, %v129, 0
    %v299 = vsel %vm204, %v130, 0
    %v302 = vsel %vm204, %v131, 0
    %v305 = vsel %vm204, %v132, 0
    %v308 = vsel %vm204, %v133, 0
    %v311 = vsel %vm204, %v134, 0
    %v314 = vsel %vm204, %v135, 0
    %316 = vmatpush.bf16.xpose.msra.mxu0 %v242
    %317 = vmatpush.bf16.xpose.msra.mxu0 %v239
    %318 = vmatpush.bf16.xpose.msra.mxu0 %v236
    %319 = vmatpush.bf16.xpose.msra.mxu0 %v233
    %320 = vmatpush.bf16.xpose.msra.mxu0 %v230
    %321 = vmatpush.bf16.xpose.msra.mxu0 %v227
    %322 = vmatpush.bf16.xpose.msra.mxu0 %v224
    %323 = vmatpush.bf16.xpose.msra.mxu0 %v221
    %324 = vmatmul.bf16.gmra.mxu0 %v206
    %v325 = vpop.f32.mrf.mxu0
    %v326 = vadd.f32 %v139, %v325
    %v327 = vpop.f32.mrf.mxu0
    %v328 = vadd.f32 %v144, %v327
    %329 = vmatmul.bf16.gmra.mxu0 %v209
    %v330 = vpop.f32.mrf.mxu0
    %v331 = vadd.f32 %v149, %v330
    %v332 = vpop.f32.mrf.mxu0
    %v333 = vadd.f32 %v154, %v332
    %334 = vmatmul.bf16.gmra.mxu0 %v212
    %v335 = vpop.f32.mrf.mxu0
    %v336 = vadd.f32 %v159, %v335
    %v337 = vpop.f32.mrf.mxu0
    %v338 = vadd.f32 %v164, %v337
    %339 = vmatmul.bf16.gmra.mxu0 %v215
    %v340 = vpop.f32.mrf.mxu0
    %v341 = vadd.f32 %v169, %v340
    %v342 = vpop.f32.mrf.mxu0
    %v343 = vadd.f32 %v174, %v342
    %344 = vmatmul.bf16.gmra.mxu0 %v218
    %v345 = vpop.f32.mrf.mxu0
    %v346 = vadd.f32 %v179, %v345
    %v347 = vpop.f32.mrf.mxu0
    %348 = vdwg.mxu0
    %349 = vmatpush.bf16.xpose.msra.mxu0 %v266
    %350 = vmatpush.bf16.xpose.msra.mxu0 %v263
    %351 = vmatpush.bf16.xpose.msra.mxu0 %v260
    %352 = vmatpush.bf16.xpose.msra.mxu0 %v257
    %353 = vmatpush.bf16.xpose.msra.mxu0 %v254
    %354 = vmatpush.bf16.xpose.msra.mxu0 %v251
    %355 = vmatpush.bf16.xpose.msra.mxu0 %v248
    %356 = vmatpush.bf16.xpose.msra.mxu0 %v245
    %357 = vmatmul.bf16.gmra.mxu0 %v206
    %v358 = vpop.f32.mrf.mxu0
    %v359 = vadd.f32 %v139, %v358
    %v360 = vpop.f32.mrf.mxu0
    %v361 = vadd.f32 %v144, %v360
    %362 = vmatmul.bf16.gmra.mxu0 %v209
    %v363 = vpop.f32.mrf.mxu0
    %v364 = vadd.f32 %v149, %v363
    %v365 = vpop.f32.mrf.mxu0
    %v366 = vadd.f32 %v154, %v365
    %367 = vmatmul.bf16.gmra.mxu0 %v212
    %v368 = vpop.f32.mrf.mxu0
    %v369 = vadd.f32 %v159, %v368
    %v370 = vpop.f32.mrf.mxu0
    %v371 = vadd.f32 %v164, %v370
    %372 = vmatmul.bf16.gmra.mxu0 %v215
    %v373 = vpop.f32.mrf.mxu0
    %v374 = vadd.f32 %v169, %v373
    %v375 = vpop.f32.mrf.mxu0
    %v376 = vadd.f32 %v174, %v375
    %377 = vmatmul.bf16.gmra.mxu0 %v218
    %v378 = vpop.f32.mrf.mxu0
    %v379 = vadd.f32 %v179, %v378
    %v380 = vpop.f32.mrf.mxu0
    %381 = vdwg.mxu0
    %382 = vmatpush.bf16.xpose.msra.mxu0 %v290
    %383 = vmatpush.bf16.xpose.msra.mxu0 %v287
    %384 = vmatpush.bf16.xpose.msra.mxu0 %v284
    %385 = vmatpush.bf16.xpose.msra.mxu0 %v281
    %386 = vmatpush.bf16.xpose.msra.mxu0 %v278
    %387 = vmatpush.bf16.xpose.msra.mxu0 %v275
    %388 = vmatpush.bf16.xpose.msra.mxu0 %v272
    %389 = vmatpush.bf16.xpose.msra.mxu0 %v269
    %390 = vmatmul.bf16.gmra.mxu0 %v206
    %v391 = vpop.f32.mrf.mxu0
    %v392 = vadd.f32 %v139, %v391
    %v393 = vpop.f32.mrf.mxu0
    %v394 = vadd.f32 %v144, %v393
    %395 = vmatmul.bf16.gmra.mxu0 %v209
    %v396 = vpop.f32.mrf.mxu0
    %v397 = vadd.f32 %v149, %v396
    %v398 = vpop.f32.mrf.mxu0
    %v399 = vadd.f32 %v154, %v398
    %400 = vmatmul.bf16.gmra.mxu0 %v212
    %v401 = vpop.f32.mrf.mxu0
    %v402 = vadd.f32 %v159, %v401
    %v403 = vpop.f32.mrf.mxu0
    %v404 = vadd.f32 %v164, %v403
    %405 = vmatmul.bf16.gmra.mxu0 %v215
    %v406 = vpop.f32.mrf.mxu0
    %v407 = vadd.f32 %v169, %v406
    %v408 = vpop.f32.mrf.mxu0
    %v409 = vadd.f32 %v174, %v408
    %410 = vmatmul.bf16.gmra.mxu0 %v218
    %v411 = vpop.f32.mrf.mxu0
    %v412 = vadd.f32 %v179, %v411
    %v413 = vpop.f32.mrf.mxu0
    %414 = vdwg.mxu0
    %415 = vmatpush.bf16.xpose.msra.mxu0 %v314
    %416 = vmatpush.bf16.xpose.msra.mxu0 %v311
    %417 = vmatpush.bf16.xpose.msra.mxu0 %v308
    %418 = vmatpush.bf16.xpose.msra.mxu0 %v305
    %419 = vmatpush.bf16.xpose.msra.mxu0 %v302
    %420 = vmatpush.bf16.xpose.msra.mxu0 %v299
    %421 = vmatpush.bf16.xpose.msra.mxu0 %v296
    %422 = vmatpush.bf16.xpose.msra.mxu0 %v293
    %423 = vmatmul.bf16.gmra.mxu0 %v206
    %v424 = vpop.f32.mrf.mxu0
    %v425 = vadd.f32 %v139, %v424
    %v426 = vpop.f32.mrf.mxu0
    %v427 = vadd.f32 %v144, %v426
    %428 = vmatmul.bf16.gmra.mxu0 %v209
    %v429 = vpop.f32.mrf.mxu0
    %v430 = vadd.f32 %v149, %v429
    %v431 = vpop.f32.mrf.mxu0
    %v432 = vadd.f32 %v154, %v431
    %433 = vmatmul.bf16.gmra.mxu0 %v212
    %v434 = vpop.f32.mrf.mxu0
    %v435 = vadd.f32 %v159, %v434
    %v436 = vpop.f32.mrf.mxu0
    %v437 = vadd.f32 %v164, %v436
    %438 = vmatmul.bf16.gmra.mxu0 %v215
    %v439 = vpop.f32.mrf.mxu0
    %v440 = vadd.f32 %v169, %v439
    %v441 = vpop.f32.mrf.mxu0
    %v442 = vadd.f32 %v174, %v441
    %443 = vmatmul.bf16.gmra.mxu0 %v218
    %v444 = vpop.f32.mrf.mxu0
    %v445 = vadd.f32 %v179, %v444
    %v446 = vpop.f32.mrf.mxu0
    %447 = vdwg.mxu0
    %v448 = vmax.f32 %v326, 0.0
    %v449 = vmax.f32 %v359, 0.0
    %v450 = vmax.f32 %v392, 0.0
    %v451 = vmax.f32 %v425, 0.0
    %v452 = vmax.f32 %v328, 0.0
    %v453 = vmax.f32 %v361, 0.0
    %v454 = vmax.f32 %v394, 0.0
    %v455 = vmax.f32 %v427, 0.0
    %v456 = vmax.f32 %v331, 0.0
    %v457 = vmax.f32 %v364, 0.0
    %v458 = vmax.f32 %v397, 0.0
    %v459 = vmax.f32 %v430, 0.0
    %v460 = vmax.f32 %v333, 0.0
    %v461 = vmax.f32 %v366, 0.0
    %v462 = vmax.f32 %v399, 0.0
    %v463 = vmax.f32 %v432, 0.0
    %v464 = vmax.f32 %v336, 0.0
    %v465 = vmax.f32 %v369, 0.0
    %v466 = vmax.f32 %v402, 0.0
    %v467 = vmax.f32 %v435, 0.0
    %v468 = vmax.f32 %v338, 0.0
    %v469 = vmax.f32 %v371, 0.0
    %v470 = vmax.f32 %v404, 0.0
    %v471 = vmax.f32 %v437, 0.0
    %v472 = vmax.f32 %v341, 0.0
    %v473 = vmax.f32 %v374, 0.0
    %v474 = vmax.f32 %v407, 0.0
    %v475 = vmax.f32 %v440, 0.0
    %v476 = vmax.f32 %v343, 0.0
    %v477 = vmax.f32 %v376, 0.0
    %v478 = vmax.f32 %v409, 0.0
    %v479 = vmax.f32 %v442, 0.0
    %v480 = vmax.f32 %v346, 0.0
    %v481 = vmax.f32 %v379, 0.0
    %v482 = vmax.f32 %v412, 0.0
    %v483 = vmax.f32 %v445, 0.0
    %v484 = vpack.c.bf16 %v452, %v448
    %v485 = vpack.c.bf16 %v453, %v449
    %v486 = vpack.c.bf16 %v454, %v450
    %v487 = vpack.c.bf16 %v455, %v451
    %v488 = vpack.c.bf16 %v460, %v456
    %v489 = vpack.c.bf16 %v461, %v457
    %v490 = vpack.c.bf16 %v462, %v458
    %v491 = vpack.c.bf16 %v463, %v459
    %v492 = vpack.c.bf16 %v468, %v464
    %v493 = vpack.c.bf16 %v469, %v465
    %v494 = vpack.c.bf16 %v470, %v466
    %v495 = vpack.c.bf16 %v471, %v467
    %v496 = vpack.c.bf16 %v476, %v472
    %v497 = vpack.c.bf16 %v477, %v473
    %v498 = vpack.c.bf16 %v478, %v474
    %v499 = vpack.c.bf16 %v479, %v475
    %v500 = vpack.c.bf16 %v480, %v480
    %v501 = vpack.c.bf16 %v481, %v481
    %v502 = vpack.c.bf16 %v482, %v482
    %v503 = vpack.c.bf16 %v483, %v483
    %v504 = vld [vmem:[%s3] sm:$0xf]
    %v505 = vld [vmem:[%s3 + $0x4] sm:$0xf]
    %v506 = vld [vmem:[%s3 + $0x8] sm:$0xf]
    %v507 = vld [vmem:[%s3 + $0xc] sm:$0xf]
    %v508 = vld [vmem:[%s3 + $0x10] sm:$0x1]
    %v514 = vunpack.c.l.b16 %v504
    %v515 = vunpack.c.l.b16 %v505
    %v516 = vunpack.c.l.b16 %v506
    %v517 = vunpack.c.l.b16 %v507
    %v518 = vunpack.c.l.b16 %v508
    %v519 = vpack.c.b16 %v515, %v514
    %v520 = vpack.c.b16 %v517, %v516
    %v521 = vpack.c.b16 %v518, %v518
    %vm522 = vcmask 531456
    %v524 = vsel %vm522, %v519, 0
    %v527 = vsel %vm522, %v520, 0
    %v530 = vsel %vm522, %v521, 0
    %vm532 = vcmask 1040384
    %v533 = vsel 0, 4294967295, 65535
    %v534 = vsel %vm532, %v533, 0
    %v536 = vand.u32 %v500, %v534
    %v539 = vand.u32 %v501, %v534
    %v542 = vand.u32 %v502, %v534
    %v545 = vand.u32 %v503, %v534
    %547 = vmatpush.bf16.msra.mxu0 0
    %548 = vmatpush.bf16.msra.mxu0 0
    %549 = vmatpush.bf16.msra.mxu0 0
    %550 = vmatpush.bf16.msra.mxu0 %v536
    %551 = vmatpush.bf16.msra.mxu0 %v496
    %552 = vmatpush.bf16.msra.mxu0 %v492
    %553 = vmatpush.bf16.msra.mxu0 %v488
    %554 = vmatpush.bf16.msra.mxu0 %v484
    %555 = vmatmul.bf16.gmra.mxu0 %v524
    %v556 = vpop.f32.mrf.mxu0
    %v557 = vadd.f32 0.0, %v556
    %v558 = vpop.f32.mrf.mxu0
    %v559 = vadd.f32 0.0, %v558
    %560 = vmatmul.bf16.gmra.mxu0 %v527
    %v561 = vpop.f32.mrf.mxu0
    %v562 = vadd.f32 0.0, %v561
    %v563 = vpop.f32.mrf.mxu0
    %v564 = vadd.f32 0.0, %v563
    %565 = vmatmul.bf16.gmra.mxu0 %v530
    %v566 = vpop.f32.mrf.mxu0
    %v567 = vadd.f32 0.0, %v566
    %v568 = vpop.f32.mrf.mxu0
    %569 = vdwg.mxu0
    %570 = vmatpush.bf16.msra.mxu0 0
    %571 = vmatpush.bf16.msra.mxu0 0
    %572 = vmatpush.bf16.msra.mxu0 0
    %573 = vmatpush.bf16.msra.mxu0 %v539
    %574 = vmatpush.bf16.msra.mxu0 %v497
    %575 = vmatpush.bf16.msra.mxu0 %v493
    %576 = vmatpush.bf16.msra.mxu0 %v489
    %577 = vmatpush.bf16.msra.mxu0 %v485
    %578 = vmatmul.bf16.gmra.mxu0 %v524
    %v579 = vpop.f32.mrf.mxu0
    %v580 = vadd.f32 0.0, %v579
    %v581 = vpop.f32.mrf.mxu0
    %v582 = vadd.f32 0.0, %v581
    %583 = vmatmul.bf16.gmra.mxu0 %v527
    %v584 = vpop.f32.mrf.mxu0
    %v585 = vadd.f32 0.0, %v584
    %v586 = vpop.f32.mrf.mxu0
    %v587 = vadd.f32 0.0, %v586
    %588 = vmatmul.bf16.gmra.mxu0 %v530
    %v589 = vpop.f32.mrf.mxu0
    %v590 = vadd.f32 0.0, %v589
    %v591 = vpop.f32.mrf.mxu0
    %592 = vdwg.mxu0
    %593 = vmatpush.bf16.msra.mxu0 0
    %594 = vmatpush.bf16.msra.mxu0 0
    %595 = vmatpush.bf16.msra.mxu0 0
    %596 = vmatpush.bf16.msra.mxu0 %v542
    %597 = vmatpush.bf16.msra.mxu0 %v498
    %598 = vmatpush.bf16.msra.mxu0 %v494
    %599 = vmatpush.bf16.msra.mxu0 %v490
    %600 = vmatpush.bf16.msra.mxu0 %v486
    %601 = vmatmul.bf16.gmra.mxu0 %v524
    %v602 = vpop.f32.mrf.mxu0
    %v603 = vadd.f32 0.0, %v602
    %v604 = vpop.f32.mrf.mxu0
    %v605 = vadd.f32 0.0, %v604
    %606 = vmatmul.bf16.gmra.mxu0 %v527
    %v607 = vpop.f32.mrf.mxu0
    %v608 = vadd.f32 0.0, %v607
    %v609 = vpop.f32.mrf.mxu0
    %v610 = vadd.f32 0.0, %v609
    %611 = vmatmul.bf16.gmra.mxu0 %v530
    %v612 = vpop.f32.mrf.mxu0
    %v613 = vadd.f32 0.0, %v612
    %v614 = vpop.f32.mrf.mxu0
    %615 = vdwg.mxu0
    %616 = vmatpush.bf16.msra.mxu0 0
    %617 = vmatpush.bf16.msra.mxu0 0
    %618 = vmatpush.bf16.msra.mxu0 0
    %619 = vmatpush.bf16.msra.mxu0 %v545
    %620 = vmatpush.bf16.msra.mxu0 %v499
    %621 = vmatpush.bf16.msra.mxu0 %v495
    %622 = vmatpush.bf16.msra.mxu0 %v491
    %623 = vmatpush.bf16.msra.mxu0 %v487
    %624 = vmatmul.bf16.gmra.mxu0 %v524
    %v625 = vpop.f32.mrf.mxu0
    %v626 = vadd.f32 0.0, %v625
    %v627 = vpop.f32.mrf.mxu0
    %v628 = vadd.f32 0.0, %v627
    %629 = vmatmul.bf16.gmra.mxu0 %v527
    %v630 = vpop.f32.mrf.mxu0
    %v631 = vadd.f32 0.0, %v630
    %v632 = vpop.f32.mrf.mxu0
    %v633 = vadd.f32 0.0, %v632
    %634 = vmatmul.bf16.gmra.mxu0 %v530
    %v635 = vpop.f32.mrf.mxu0
    %v636 = vadd.f32 0.0, %v635
    %v637 = vpop.f32.mrf.mxu0
    %638 = vdwg.mxu0
    %v639 = vmax.f32 %v557, 0.0
    %v640 = vmax.f32 %v580, 0.0
    %v641 = vmax.f32 %v603, 0.0
    %v642 = vmax.f32 %v626, 0.0
    %v643 = vmax.f32 %v559, 0.0
    %v644 = vmax.f32 %v582, 0.0
    %v645 = vmax.f32 %v605, 0.0
    %v646 = vmax.f32 %v628, 0.0
    %v647 = vmax.f32 %v562, 0.0
    %v648 = vmax.f32 %v585, 0.0
    %v649 = vmax.f32 %v608, 0.0
    %v650 = vmax.f32 %v631, 0.0
    %v651 = vmax.f32 %v564, 0.0
    %v652 = vmax.f32 %v587, 0.0
    %v653 = vmax.f32 %v610, 0.0
    %v654 = vmax.f32 %v633, 0.0
    %v655 = vmax.f32 %v567, 0.0
    %v656 = vmax.f32 %v590, 0.0
    %v657 = vmax.f32 %v613, 0.0
    %v658 = vmax.f32 %v636, 0.0
    %v659 = vpack.c.bf16 %v643, %v639
    %v660 = vpack.c.bf16 %v644, %v640
    %v661 = vpack.c.bf16 %v645, %v641
    %v662 = vpack.c.bf16 %v646, %v642
    %v663 = vpack.c.bf16 %v651, %v647
    %v664 = vpack.c.bf16 %v652, %v648
    %v665 = vpack.c.bf16 %v653, %v649
    %v666 = vpack.c.bf16 %v654, %v650
    %v667 = vpack.c.bf16 %v655, %v655
    %v668 = vpack.c.bf16 %v656, %v656
    %v669 = vpack.c.bf16 %v657, %v657
    %v670 = vpack.c.bf16 %v658, %v658
    %v671 = vld [vmem:[%s4] sm:$0x1]
    %vm672 = vcmask 269312
    %v674 = vsel %vm672, %v671, 0
    %v677 = vand.u32 %v667, %v534
    %v680 = vand.u32 %v668, %v534
    %v683 = vand.u32 %v669, %v534
    %v686 = vand.u32 %v670, %v534
    %688 = vmatpush.bf16.msra.mxu0 0
    %689 = vmatpush.bf16.msra.mxu0 0
    %690 = vmatpush.bf16.msra.mxu0 0
    %691 = vmatpush.bf16.msra.mxu0 0
    %692 = vmatpush.bf16.msra.mxu0 0
    %693 = vmatpush.bf16.msra.mxu0 %v677
    %694 = vmatpush.bf16.msra.mxu0 %v663
    %695 = vmatpush.bf16.msra.mxu0 %v659
    %696 = vmatmul.bf16.gmra.mxu0 %v674
    %v697 = vpop.f32.mrf.mxu0
    %v698 = vadd.f32 0.0, %v697
    %v699 = vpop.f32.mrf.mxu0
    %700 = vdwg.mxu0
    %701 = vmatpush.bf16.msra.mxu0 0
    %702 = vmatpush.bf16.msra.mxu0 0
    %703 = vmatpush.bf16.msra.mxu0 0
    %704 = vmatpush.bf16.msra.mxu0 0
    %705 = vmatpush.bf16.msra.mxu0 0
    %706 = vmatpush.bf16.msra.mxu0 %v680
    %707 = vmatpush.bf16.msra.mxu0 %v664
    %708 = vmatpush.bf16.msra.mxu0 %v660
    %709 = vmatmul.bf16.gmra.mxu0 %v674
    %v710 = vpop.f32.mrf.mxu0
    %v711 = vadd.f32 0.0, %v710
    %v712 = vpop.f32.mrf.mxu0
    %713 = vdwg.mxu0
    %714 = vmatpush.bf16.msra.mxu0 0
    %715 = vmatpush.bf16.msra.mxu0 0
    %716 = vmatpush.bf16.msra.mxu0 0
    %717 = vmatpush.bf16.msra.mxu0 0
    %718 = vmatpush.bf16.msra.mxu0 0
    %719 = vmatpush.bf16.msra.mxu0 %v683
    %720 = vmatpush.bf16.msra.mxu0 %v665
    %721 = vmatpush.bf16.msra.mxu0 %v661
    %722 = vmatmul.bf16.gmra.mxu0 %v674
    %v723 = vpop.f32.mrf.mxu0
    %v724 = vadd.f32 0.0, %v723
    %v725 = vpop.f32.mrf.mxu0
    %726 = vdwg.mxu0
    %727 = vmatpush.bf16.msra.mxu0 0
    %728 = vmatpush.bf16.msra.mxu0 0
    %729 = vmatpush.bf16.msra.mxu0 0
    %730 = vmatpush.bf16.msra.mxu0 0
    %731 = vmatpush.bf16.msra.mxu0 0
    %732 = vmatpush.bf16.msra.mxu0 %v686
    %733 = vmatpush.bf16.msra.mxu0 %v666
    %734 = vmatpush.bf16.msra.mxu0 %v662
    %735 = vmatmul.bf16.gmra.mxu0 %v674
    %v736 = vpop.f32.mrf.mxu0
    %v737 = vadd.f32 0.0, %v736
    %v738 = vpop.f32.mrf.mxu0
    %739 = vdwg.mxu0
    %v740 = vsub.f32 0.0, %v698
    %v741 = vsub.f32 0.0, %v711
    %v742 = vsub.f32 0.0, %v724
    %v743 = vsub.f32 0.0, %v737
    %v744 = vmul.f32 %v740, 1.442695
    %v745 = vpow.pop %v744
    %v746 = vmul.f32 %v741, 1.442695
    %v747 = vpow.pop %v746
    %v748 = vmul.f32 %v742, 1.442695
    %v749 = vpow.pop %v748
    %v750 = vmul.f32 %v743, 1.442695
    %v751 = vpow.pop %v750
    %v752 = vadd.f32 %v745, 1.0
    %v753 = vadd.f32 %v747, 1.0
    %v754 = vadd.f32 %v749, 1.0
    %v755 = vadd.f32 %v751, 1.0
    %v756 = vrcp.pop %v752
    %v757 = vmul.f32 %v752, %v756
    %v758 = vsub.f32 1.0, %v757
    %v759 = vmul.f32 %v756, %v758
    %v760 = vadd.f32 %v756, %v759
    %vm761 = vweird.f32 %v752
    %vm762 = vweird.f32 %v756
    %vm763 = vmor %vm761, %vm762
    %v764 = vsel %vm763, %v756, %v760
    %v765 = vand.u32 2147483647, %v752
    %vm766 = vcmp.eq.f32.partialorder %v765, 8.507059e+37
    %v767 = vand.u32 %v752, 2147483648
    %v768 = vor.u32 1.1754944e-38, %v767
    %v769 = vsel %vm766, %v768, %v764
    %v770 = vmul.f32 1.0, %v769
    %v771 = vrcp.pop %v753
    %v772 = vmul.f32 %v753, %v771
    %v773 = vsub.f32 1.0, %v772
    %v774 = vmul.f32 %v771, %v773
    %v775 = vadd.f32 %v771, %v774
    %vm776 = vweird.f32 %v753
    %vm777 = vweird.f32 %v771
    %vm778 = vmor %vm776, %vm777
    %v779 = vsel %vm778, %v771, %v775
    %v780 = vand.u32 2147483647, %v753
    %vm781 = vcmp.eq.f32.partialorder %v780, 8.507059e+37
    %v782 = vand.u32 %v753, 2147483648
    %v783 = vor.u32 1.1754944e-38, %v782
    %v784 = vsel %vm781, %v783, %v779
    %v785 = vmul.f32 1.0, %v784
    %v786 = vrcp.pop %v754
    %v787 = vmul.f32 %v754, %v786
    %v788 = vsub.f32 1.0, %v787
    %v789 = vmul.f32 %v786, %v788
    %v790 = vadd.f32 %v786, %v789
    %vm791 = vweird.f32 %v754
    %vm792 = vweird.f32 %v786
    %vm793 = vmor %vm791, %vm792
    %v794 = vsel %vm793, %v786, %v790
    %v795 = vand.u32 2147483647, %v754
    %vm796 = vcmp.eq.f32.partialorder %v795, 8.507059e+37
    %v797 = vand.u32 %v754, 2147483648
    %v798 = vor.u32 1.1754944e-38, %v797
    %v799 = vsel %vm796, %v798, %v794
    %v800 = vmul.f32 1.0, %v799
    %v801 = vrcp.pop %v755
    %v802 = vmul.f32 %v755, %v801
    %v803 = vsub.f32 1.0, %v802
    %v804 = vmul.f32 %v801, %v803
    %v805 = vadd.f32 %v801, %v804
    %vm806 = vweird.f32 %v755
    %vm807 = vweird.f32 %v801
    %vm808 = vmor %vm806, %vm807
    %v809 = vsel %vm808, %v801, %v805
    %v810 = vand.u32 2147483647, %v755
    %vm811 = vcmp.eq.f32.partialorder %v810, 8.507059e+37
    %v812 = vand.u32 %v755, 2147483648
    %v813 = vor.u32 1.1754944e-38, %v812
    %v814 = vsel %vm811, %v813, %v809
    %v815 = vmul.f32 1.0, %v814
    %v820 = vrot.slane %v785, 7
    %v821 = vrot.slane %v800, 6
    %v822 = vrot.slane %v815, 5
    %v823 = vsel %vm532, %v770, %v820
    %vm824 = vcmask 1042434
    %v825 = vsel %vm824, %v821, %v822
    %vm826 = vcmask 1041408
    %v827 = vsel %vm826, %v823, %v825
    %v829 = vlaneseq
    %vm830 = vcmp.ge.s32.totalorder %v829, 0
    %vm831 = vcmp.lt.s32.totalorder %v829, 512
    %vm832 = vmand %vm830, %vm831
    %833 = vst.msk [vmem:[#allocation2] sm:$0xf] %vm832, %v827
    // Predicated region
    $region22: #{tpu_custom_call.1} parent=1 // pred_check
      _
    $region23: #{tpu_custom_call.1} parent=1 // pred_check_branch
      %835 = sbr.rel (0) target = $region25
    $region24: #{tpu_custom_call.1} parent=1 // pred_region
      %837 = vsyncadd [#allocation3], 0
      %s839 = sshll.u32 [#allocation2], 4
      %s840 = int_to_ptr.vmem [resolvable:$true] %s839
      %s841 = sshll.u32 %s5, 4
      %s842 = int_to_ptr.hbm [resolvable:$true] %s841
      %844 = dma.vmem_to_hbm [thread:$0]  %s840, 64, %s842, [#allocation3]
    $region25: #{tpu_custom_call.1} parent=1 // pred_fallthru
      _
    // Predicated region
    $region26: #{tpu_custom_call.1} parent=1 // pred_check
      _
    $region27: #{tpu_custom_call.1} parent=1 // pred_check_branch
      %846 = sbr.rel (0) target = $region29
    $region28: #{tpu_custom_call.1} parent=1 // pred_region
      %848 = dma.done [#allocation3], 64
    $region29: #{tpu_custom_call.1} parent=1 // pred_fallthru
      _
    %849 = vsyncpa [#allocation3], 1

</llo_original>
